<compile_context>
chip_gen: v7x
topology: tpu7x:2x2x1
jax: 0.10.0
libtpu: 0.0.40
codegen_flags: <defaults>
</compile_context>

<pallas_src>
import functools

import jax
import jax.numpy as jnp
from jax import lax
from jax.experimental import pallas as pl
from jax.experimental.pallas import tpu as pltpu


_XX_DIMS = (((1,), (1,)), ((), ()))     # contract dim 1 of both operands: X @ X.T
_VMEM_LIMIT_BYTES = 48 * 1024 * 1024    # fits v7x (64 MiB); fine on v5e/v6e (128 MiB)


def _round_up(x, m):
    return ((x + m - 1) // m) * m


def _pick_tile(dim, preferred, unit):
    """Largest multiple of `unit` dividing `dim` (dim already a multiple of
    `unit`) that is <= max(preferred, unit)."""
    t = max(unit, min(preferred - preferred % unit, dim))
    while dim % t != 0:
        t -= unit
    return t


def _pad2d(x, rows, cols):
    r, c = x.shape
    if r == rows and c == cols:
        return x
    return jnp.pad(x, ((0, rows - r), (0, cols - c)))


# ----------------------- gram-matrix kernels (init path) -----------------------

def _gram_single_kernel(x_ref, g_ref, acc_ref, *, inv_norm):
    """Whole gram fits in one block: single X input (no duplicate DMA)."""
    k = pl.program_id(0)

    @pl.when(k == 0)
    def _():
        acc_ref[...] = jnp.zeros_like(acc_ref)

    acc_ref[...] += lax.dot_general(
        x_ref[...], x_ref[...], _XX_DIMS, preferred_element_type=jnp.float32)

    @pl.when(k == pl.num_programs(0) - 1)
    def _():
        g_ref[...] = (acc_ref[...] * inv_norm).astype(g_ref.dtype)


def _gram_tiled_kernel(xi_ref, xj_ref, g_ref, acc_ref, *, inv_norm):
    """Full (i, j, k) tiled gram (init only, runs once; no symmetry trick)."""
    k = pl.program_id(2)

    @pl.when(k == 0)
    def _():
        acc_ref[...] = jnp.zeros_like(acc_ref)

    acc_ref[...] += lax.dot_general(
        xi_ref[...], xj_ref[...], _XX_DIMS, preferred_element_type=jnp.float32)

    @pl.when(k == pl.num_programs(2) - 1)
    def _():
        g_ref[...] = (acc_ref[...] * inv_norm).astype(g_ref.dtype)


# ----------------------------- style-loss kernels ------------------------------

def _style_loss_single_kernel(x_ref, tgt_ref, loss_ref, acc_ref, *, inv_norm):
    """Single gram block: one X input, gram never leaves VMEM."""
    k = pl.program_id(0)

    @pl.when(k == 0)
    def _():
        acc_ref[...] = jnp.zeros_like(acc_ref)

    acc_ref[...] += lax.dot_general(
        x_ref[...], x_ref[...], _XX_DIMS, preferred_element_type=jnp.float32)

    @pl.when(k == pl.num_programs(0) - 1)
    def _():
        diff = acc_ref[...] * inv_norm - tgt_ref[...]
        d2 = diff * diff
        m, n = d2.shape
        # Fold sublane groups of 8 with plain VPU adds (no deep XLU reduce);
        # the tiny final reduction to a scalar happens once in the wrapper.
        loss_ref[...] = d2.reshape(m // 8, 8, n).sum(axis=0)


def _style_loss_tri_kernel(ii_ref, jj_ref, xi_ref, xj_ref, tgt_ref,
                           loss_ref, acc_ref, *, inv_norm):
    """Triangular (j >= i) block pairs; off-diagonal pairs weighted 2x."""
    t = pl.program_id(0)
    k = pl.program_id(1)

    @pl.when(k == 0)
    def _():
        acc_ref[...] = jnp.zeros_like(acc_ref)

    acc_ref[...] += lax.dot_general(
        xi_ref[...], xj_ref[...], _XX_DIMS, preferred_element_type=jnp.float32)

    @pl.when(k == pl.num_programs(1) - 1)
    def _():
        # Off-diagonal blocks stand in for their mirrored twin -> weight 2.
        w = jnp.where(ii_ref[t] == jj_ref[t], 1.0, 2.0).astype(jnp.float32)
        diff = acc_ref[...] * inv_norm - tgt_ref[...]
        d2 = diff * diff
        m, n = d2.shape
        loss_ref[...] = w * d2.reshape(m // 8, 8, n).sum(axis=0)


# --------------------------------- wrappers ------------------------------------

@functools.partial(jax.jit, static_argnames=(
    "block_m", "block_k", "use_bf16_matmul", "vmem_limit_bytes"))
def gram_matrix(features, *, block_m=512, block_k=1024,
                use_bf16_matmul=False, vmem_limit_bytes=_VMEM_LIMIT_BYTES):
    """Pallas-backed gram matrix (normalization matches the PyTorch module)."""
    b, h, w, f = features.shape
    M, K = b * h, w * f
    inv_norm = 1.0 / float(b * h * w * f)
    xdt = jnp.bfloat16 if use_bf16_matmul else jnp.float32

    single = _round_up(M, 8) <= block_m
    m_pad = _round_up(M, 8) if single else _round_up(M, 128)
    k_pad = _round_up(K, 128)
    x = _pad2d(features.reshape(M, K).astype(xdt), m_pad, k_pad)
    tk = _pick_tile(k_pad, block_k, 128)

    if single:
        g = pl.pallas_call(
            functools.partial(_gram_single_kernel, inv_norm=inv_norm),
            out_shape=jax.ShapeDtypeStruct((m_pad, m_pad), jnp.float32),
            grid_spec=pltpu.PrefetchScalarGridSpec(
                num_scalar_prefetch=0,
                grid=(k_pad // tk,),
                in_specs=[pl.BlockSpec((m_pad, tk), lambda k: (0, k))],
                out_specs=pl.BlockSpec((m_pad, m_pad), lambda k: (0, 0)),
                scratch_shapes=[pltpu.VMEM((m_pad, m_pad), jnp.float32)],
            ),
            compiler_params=pltpu.CompilerParams(
                dimension_semantics=("arbitrary",),
                vmem_limit_bytes=vmem_limit_bytes),
            cost_estimate=pl.CostEstimate(
                flops=2 * m_pad * m_pad * k_pad,
                transcendentals=0,
                bytes_accessed=m_pad * k_pad * x.dtype.itemsize
                               + m_pad * m_pad * 4),
        )(x)
    else:
        tb = _pick_tile(m_pad, block_m, 128)
        gb = m_pad // tb
        g = pl.pallas_call(
            functools.partial(_gram_tiled_kernel, inv_norm=inv_norm),
            out_shape=jax.ShapeDtypeStruct((m_pad, m_pad), jnp.float32),
            grid_spec=pltpu.PrefetchScalarGridSpec(
                num_scalar_prefetch=0,
                grid=(gb, gb, k_pad // tk),
                in_specs=[
                    pl.BlockSpec((tb, tk), lambda i, j, k: (i, k)),
                    pl.BlockSpec((tb, tk), lambda i, j, k: (j, k)),
                ],
                out_specs=pl.BlockSpec((tb, tb), lambda i, j, k: (i, j)),
                scratch_shapes=[pltpu.VMEM((tb, tb), jnp.float32)],
            ),
            compiler_params=pltpu.CompilerParams(
                dimension_semantics=("parallel", "parallel", "arbitrary"),
                vmem_limit_bytes=vmem_limit_bytes),
            cost_estimate=pl.CostEstimate(
                flops=2 * m_pad * m_pad * k_pad,
                transcendentals=0,
                bytes_accessed=gb * gb * 2 * tb * k_pad * x.dtype.itemsize
                               + m_pad * m_pad * 4),
        )(x, x)

    return g[:M, :M] if m_pad != M else g


@functools.partial(jax.jit, static_argnames=(
    "block_m", "block_k", "use_bf16_matmul", "vmem_limit_bytes"))
def style_loss(features, target_gram, *, block_m=512, block_k=1024,
               use_bf16_matmul=None, vmem_limit_bytes=_VMEM_LIMIT_BYTES):
    """mse_loss(gram_matrix(features), target_gram); gram never hits HBM."""
    b, h, w, f = features.shape
    M, K = b * h, w * f
    inv_norm = 1.0 / float(b * h * w * f)

    single = _round_up(M, 8) <= block_m
    if use_bf16_matmul is None:
        # bf16 only pays when X row panels are re-streamed across several gram
        # blocks; in the single-block case the extra cast pass over X loses.
        use_bf16_matmul = not single
    xdt = jnp.bfloat16 if use_bf16_matmul else jnp.float32

    m_pad = _round_up(M, 8) if single else _round_up(M, 128)
    k_pad = _round_up(K, 128)
    x = _pad2d(features.reshape(M, K).astype(xdt), m_pad, k_pad)
    tgt = _pad2d(target_gram.astype(jnp.float32), m_pad, m_pad)
    tk = _pick_tile(k_pad, block_k, 128)

    if single:
        partial = pl.pallas_call(
            functools.partial(_style_loss_single_kernel, inv_norm=inv_norm),
            out_shape=jax.ShapeDtypeStruct((8, m_pad), jnp.float32),
            grid_spec=pltpu.PrefetchScalarGridSpec(
                num_scalar_prefetch=0,
                grid=(k_pad // tk,),
                in_specs=[
                    pl.BlockSpec((m_pad, tk), lambda k: (0, k)),
                    pl.BlockSpec((m_pad, m_pad), lambda k: (0, 0)),
                ],
                out_specs=pl.BlockSpec((8, m_pad), lambda k: (0, 0)),
                scratch_shapes=[pltpu.VMEM((m_pad, m_pad), jnp.float32)],
            ),
            compiler_params=pltpu.CompilerParams(
                dimension_semantics=("arbitrary",),
                vmem_limit_bytes=vmem_limit_bytes),
            cost_estimate=pl.CostEstimate(
                flops=2 * m_pad * m_pad * k_pad,
                transcendentals=0,
                bytes_accessed=m_pad * k_pad * x.dtype.itemsize
                               + m_pad * m_pad * 4),
        )(x, tgt)
    else:
        tb = _pick_tile(m_pad, block_m, 128)
        gb = m_pad // tb
        pairs = [(i, j) for i in range(gb) for j in range(i, gb)]
        n_pairs = len(pairs)                      # gb * (gb + 1) // 2
        ii = jnp.asarray([p[0] for p in pairs], dtype=jnp.int32)
        jj = jnp.asarray([p[1] for p in pairs], dtype=jnp.int32)

        partial = pl.pallas_call(
            functools.partial(_style_loss_tri_kernel, inv_norm=inv_norm),
            out_shape=jax.ShapeDtypeStruct((n_pairs, 8, tb), jnp.float32),
            grid_spec=pltpu.PrefetchScalarGridSpec(
                num_scalar_prefetch=2,
                grid=(n_pairs, k_pad // tk),
                in_specs=[
                    pl.BlockSpec((tb, tk), lambda t, k, ii, jj: (ii[t], k)),
                    pl.BlockSpec((tb, tk), lambda t, k, ii, jj: (jj[t], k)),
                    pl.BlockSpec((tb, tb), lambda t, k, ii, jj: (ii[t], jj[t])),
                ],
                # Per-pair partials; the pair axis is shardable across cores.
                out_specs=pl.BlockSpec((None, 8, tb),
                                       lambda t, k, ii, jj: (t, 0, 0)),
                scratch_shapes=[pltpu.VMEM((tb, tb), jnp.float32)],
            ),
            compiler_params=pltpu.CompilerParams(
                dimension_semantics=("parallel", "arbitrary"),
                vmem_limit_bytes=vmem_limit_bytes),
            cost_estimate=pl.CostEstimate(
                flops=2 * n_pairs * tb * tb * k_pad,
                transcendentals=0,
                bytes_accessed=n_pairs * (2 * tb * k_pad * x.dtype.itemsize
                                          + tb * tb * 4)),
        )(ii, jj, x, x, tgt)

    # Mean over the true (M, M) gram entries; padded entries contribute 0.
    return jnp.sum(partial) / float(M * M)


class StyleLoss:
    """JAX/Pallas equivalent of the PyTorch StyleLoss module.

    Like the PyTorch module, `__call__` stores the latest loss on the
    instance (eager Python state); use the functional `gram_matrix` /
    `style_loss` directly if you need everything under one outer jax.jit.
    """

    gram_matrix = staticmethod(gram_matrix)

    def __init__(self, target_feature, *, block_m=512, block_k=1024,
                 use_bf16_matmul=None, vmem_limit_bytes=_VMEM_LIMIT_BYTES):
        b, h, _, _ = target_feature.shape
        if use_bf16_matmul is None:
            use_bf16_matmul = _round_up(b * h, 8) > block_m
        self._cfg = dict(block_m=block_m, block_k=block_k,
                         use_bf16_matmul=bool(use_bf16_matmul),
                         vmem_limit_bytes=vmem_limit_bytes)
        self.target = gram_matrix(target_feature, **self._cfg)
        self.loss = jnp.zeros((), jnp.float32)      # mse(target, target) == 0

    def __call__(self, features):
        self.loss = style_loss(features, self.target, **self._cfg)
        return features                              # forward returns input unchanged

    def get_loss(self):
        return self.loss


if __name__ == "__main__":
    root = jax.random.PRNGKey(0)

    def ref_gram(v):
        b, h, w, f = v.shape
        xf = v.reshape(b * h, w * f).astype(jnp.float32)
        g = jnp.matmul(xf, xf.T, precision=lax.Precision.HIGHEST)
        return g / (b * h * w * f)

    def run_case(name, key, shape, gram_rtol=1e-3, gram_atol=1e-6,
                 loss_rtol=2e-4, loss_atol=1e-9, **cfg):
        k_tgt, k_feat = jax.random.split(key)
        target_feature = jax.random.normal(k_tgt, shape, jnp.float32)
        features = jax.random.normal(k_feat, shape, jnp.float32)

        layer = StyleLoss(target_feature, **cfg)
        out = jax.block_until_ready(layer(features))
        loss = jax.block_until_ready(layer.get_loss())

        ref_tgt = ref_gram(target_feature)
        ref_loss = jnp.mean((ref_gram(features) - ref_tgt) ** 2)

        assert out.shape == features.shape and bool(jnp.all(out == features)), name
        assert jnp.allclose(layer.target, ref_tgt,
                            rtol=gram_rtol, atol=gram_atol), (name, "gram mismatch")
        assert jnp.allclose(loss, ref_loss,
                            rtol=loss_rtol, atol=loss_atol), (name, float(loss),
                                                              float(ref_loss))

    keys = jax.random.split(root, 4)

    # 1) Small canonical case: single-block (one-input, DMA-deduped) kernels, f32.
    run_case("single_block", keys[0], (2, 16, 16, 16))

    # 2) Non-(8,128)-aligned dims: exercises zero-padding of M and K.
    run_case("padded", keys[1], (2, 13, 7, 36))

    # 3) Multi-block: triangular (j >= i) scalar-prefetch grid with 2x
    #    off-diagonal weighting, forced f32 for a strict check.
    run_case("triangular_f32", keys[2], (2, 128, 8, 32),
             block_m=128, block_k=128, use_bf16_matmul=False,
             loss_rtol=1e-3)

    # 4) Same shape, bf16 MXU inputs (f32 accumulation): looser tolerances.
    run_case("triangular_bf16", keys[3], (2, 128, 8, 32),
             block_m=128, block_k=128, use_bf16_matmul=True,
             gram_rtol=5e-2, gram_atol=1e-5, loss_rtol=1e-1, loss_atol=1e-8)

    print("KERNEL_OK")
</pallas_src>

<mosaic_0001>
module attributes {stable_mosaic.version = 11 : i64} {
  func.func @_gram_single_kernel(%arg0: i32, %arg1: memref<32x256xf32, #tpu.memory_space<vmem>>, %arg2: memref<32x32xf32, #tpu.memory_space<vmem>>, %arg3: memref<32x32xf32, #tpu.memory_space<vmem>>) attributes {dimension_semantics = [#tpu.dimension_semantics<arbitrary>], iteration_bounds = array<i64: 1>, scalar_prefetch = 0 : i64, scratch_operands = 1 : i64, tpu.core_type = #tpu.core_type<tc>, window_params = [{transform_indices = @transform_0, window_bounds = array<i64: 32, 256>}, {pipeline_mode = #tpu.pipeline_mode<synchronous>, transform_indices = @transform_1, window_bounds = array<i64: 32, 32>}]} {
    %c0_i32 = arith.constant 0 : i32
    %0 = arith.cmpi eq, %arg0, %c0_i32 : i32
    %1 = arith.extui %0 : i1 to i32
    %c0_i32_0 = arith.constant 0 : i32
    %2 = arith.cmpi ne, %1, %c0_i32_0 : i32
    scf.if %2 {
      %cst_10 = arith.constant 0.000000e+00 : f32
      %12 = vector.broadcast %cst_10 : f32 to vector<32x32xf32>
      %c0_11 = arith.constant 0 : index
      %c0_12 = arith.constant 0 : index
      %13 = vector.load %arg3[%c0_11, %c0_12] : memref<32x32xf32, #tpu.memory_space<vmem>>, vector<32x32xf32>
      tpu.vector_store %arg3[%c0_11, %c0_12], %12 {strides = array<i32>} : memref<32x32xf32, #tpu.memory_space<vmem>>, vector<32x32xf32>,
    } else {
    }
    %c0 = arith.constant 0 : index
    %c0_1 = arith.constant 0 : index
    %3 = vector.load %arg3[%c0, %c0_1] : memref<32x32xf32, #tpu.memory_space<vmem>>, vector<32x32xf32>
    %c0_2 = arith.constant 0 : index
    %c0_3 = arith.constant 0 : index
    %4 = vector.load %arg1[%c0_2, %c0_3] : memref<32x256xf32, #tpu.memory_space<vmem>>, vector<32x256xf32>
    %c0_4 = arith.constant 0 : index
    %c0_5 = arith.constant 0 : index
    %5 = vector.load %arg1[%c0_4, %c0_5] : memref<32x256xf32, #tpu.memory_space<vmem>>, vector<32x256xf32>
    %cst = arith.constant dense<0.000000e+00> : vector<32x32xf32>
    %6 = tpu.matmul %4, %5, %cst {dimension_numbers = #tpu.dot_dimension_numbers<[1], [1], [0], [0], [0, 0, 1, 0], [], []>} : vector<32x256xf32>, vector<32x256xf32>, vector<32x32xf32> -> vector<32x32xf32>
    %7 = arith.addf %3, %6 : vector<32x32xf32>
    %c0_6 = arith.constant 0 : index
    %c0_7 = arith.constant 0 : index
    %8 = vector.load %arg3[%c0_6, %c0_7] : memref<32x32xf32, #tpu.memory_space<vmem>>, vector<32x32xf32>
    tpu.vector_store %arg3[%c0_6, %c0_7], %7 {strides = array<i32>} : memref<32x32xf32, #tpu.memory_space<vmem>>, vector<32x32xf32>,
    %c0_i32_8 = arith.constant 0 : i32
    %9 = arith.cmpi eq, %arg0, %c0_i32_8 : i32
    %10 = arith.extui %9 : i1 to i32
    %c0_i32_9 = arith.constant 0 : i32
    %11 = arith.cmpi ne, %10, %c0_i32_9 : i32
    scf.if %11 {
      %c0_10 = arith.constant 0 : index
      %c0_11 = arith.constant 0 : index
      %12 = vector.load %arg3[%c0_10, %c0_11] : memref<32x32xf32, #tpu.memory_space<vmem>>, vector<32x32xf32>
      %cst_12 = arith.constant 1.22070313E-4 : f32
      %13 = vector.broadcast %cst_12 : f32 to vector<32x32xf32>
      %14 = arith.mulf %12, %13 : vector<32x32xf32>
      %c0_13 = arith.constant 0 : index
      %c0_14 = arith.constant 0 : index
      %15 = vector.load %arg2[%c0_13, %c0_14] : memref<32x32xf32, #tpu.memory_space<vmem>>, vector<32x32xf32>
      tpu.vector_store %arg2[%c0_13, %c0_14], %14 {strides = array<i32>} : memref<32x32xf32, #tpu.memory_space<vmem>>, vector<32x32xf32>,
    } else {
    }
    return
  }
  func.func @transform_0(%arg0: i32) -> (i32, i32) {
    %c0_i32 = arith.constant 0 : i32
    %c0_i32_0 = arith.constant 0 : i32
    return %c0_i32, %arg0 : i32, i32
  }
  func.func @transform_1(%arg0: i32) -> (i32, i32) {
    %c0_i32 = arith.constant 0 : i32
    %c0_i32_0 = arith.constant 0 : i32
    %c0_i32_1 = arith.constant 0 : i32
    return %c0_i32, %c0_i32_0 : i32, i32
  }
}

</mosaic_0001>

<llo_original>
// kernel: gram_matrix.1
$region0: #{gram_matrix.1}
  #allocation0 [shape = 'u32[]', space=smem, size = 0x4, offset = 0x4, fixed_abs, tag = 'smem constant byte address 0x4 - core index']
  #allocation1 [shape = 'u32[144,128]{1,0:T(1,128)}', space=vmem, size = 0x12000, scoped, tag = 'internal scratch']
  #allocation2 [shape = 'f32[32,32]{1,0:T(8,128)}', space=vmem, size = 0x4000, scoped, tag = 'scratch operand']
  %s0 = inlined_call_operand.vmem [shape: f32[32,256], index: 0, kind: input, shape index: {}]
  %s1 = inlined_call_operand.hbm [shape: f32[32,32], index: 1, kind: output, shape index: {}]
  %s2 = sld [smem:[#allocation0]]
  $region22: #{gram_matrix.1} parent=0
    _
  %s4 = ssub.s32 1, %s2
  %s5 = scalar_select 0, %s4, %s2
  $region1: #{gram_matrix.1} parent=0
    #allocation3 [shape = 'u8[16384]{0}', space=vmem, size = 0x4000, scoped, tag = 'output window, operand 0, single buffered']
    #allocation4 [shape = 's32[1]{0}', space=sflag, size = 0x4, scoped, tag = 'scoped memory for gram_matrix.1']
    %6 = vsyncpa [#allocation4], 0
    // Predicated region
    $region2: #{gram_matrix.1} parent=1 // pred_check
      _
    $region3: #{gram_matrix.1} parent=1 // pred_check_branch
      %8 = sbr.rel (0) target = $region5
    $region4: #{gram_matrix.1} parent=1 // pred_region
      _
    $region5: #{gram_matrix.1} parent=1 // pred_fallthru
      _
    %p9 = scmp.eq.s32.totalorder 0, 0
    // Predicated region
    $region6: #{gram_matrix.1} parent=1 // pred_check
      %p10 = pneg %p9
    $region7: #{gram_matrix.1} parent=1 // pred_check_branch
      %12 = sbr.rel (%p10) target = $region9
    $region8: #{gram_matrix.1} parent=1 // pred_region
      %vm13 = vcmask 261120
      %14 = vst.msk [vmem:[#allocation2] sm:$0xff] %vm13, 0.0
      %15 = vst.msk [vmem:[#allocation2 + $0x8] sm:$0xff] %vm13, 0.0
      %16 = vst.msk [vmem:[#allocation2 + $0x10] sm:$0xff] %vm13, 0.0
      %17 = vst.msk [vmem:[#allocation2 + $0x18] sm:$0xff] %vm13, 0.0
    $region9: #{gram_matrix.1} parent=1 // pred_fallthru
      _
    %v18 = vld [vmem:[#allocation2] sm:$0xff]
    %v19 = vld [vmem:[#allocation2 + $0x8] sm:$0xff]
    %v20 = vld [vmem:[#allocation2 + $0x10] sm:$0xff]
    %v21 = vld [vmem:[#allocation2 + $0x18] sm:$0xff]
    %v22 = vld [vmem:[%s0] sm:$0xff]
    %v23 = vld [vmem:[%s0 + $0x8] sm:$0xff]
    %v24 = vld [vmem:[%s0 + $0x10] sm:$0xff]
    %v25 = vld [vmem:[%s0 + $0x18] sm:$0xff]
    %v26 = vld [vmem:[%s0 + $0x20] sm:$0xff]
    %v27 = vld [vmem:[%s0 + $0x28] sm:$0xff]
    %v28 = vld [vmem:[%s0 + $0x30] sm:$0xff]
    %v29 = vld [vmem:[%s0 + $0x38] sm:$0xff]
    %30 = vmatprep.subr.mxu0 %v23
    %31 = vmatpush1.xpose.msra.mxu0 %v22
    %32 = vmatprep.subr.mxu0 %v25
    %33 = vmatpush1.xpose.msra.mxu0 %v24
    %34 = vmatprep.subr.mxu0 %v27
    %35 = vmatpush1.xpose.msra.mxu0 %v26
    %36 = vmatprep.subr.mxu0 %v29
    %37 = vmatpush1.xpose.msra.mxu0 %v28
    %38 = vmatprep.subr.mxu0 0.0
    %39 = vmatpush1.xpose.msra.mxu0 0.0
    %40 = vmatprep.subr.mxu0 0.0
    %41 = vmatpush1.xpose.msra.mxu0 0.0
    %42 = vmatprep.subr.mxu0 0.0
    %43 = vmatpush1.xpose.msra.mxu0 0.0
    %44 = vmatprep.subr.mxu0 0.0
    %45 = vmatpush1.xpose.msra.mxu0 0.0
    %46 = vmatprep.subr.mxu0 0.0
    %47 = vmatpush1.xpose.msra.mxu0 0.0
    %48 = vmatprep.subr.mxu0 0.0
    %49 = vmatpush1.xpose.msra.mxu0 0.0
    %50 = vmatprep.subr.mxu0 0.0
    %51 = vmatpush1.xpose.msra.mxu0 0.0
    %52 = vmatprep.subr.mxu0 0.0
    %53 = vmatpush1.xpose.msra.mxu0 0.0
    %54 = vmatprep.subr.mxu0 0.0
    %55 = vmatpush1.xpose.msra.mxu0 0.0
    %56 = vmatprep.subr.mxu0 0.0
    %57 = vmatpush1.xpose.msra.mxu0 0.0
    %58 = vmatprep.subr.mxu0 0.0
    %59 = vmatpush1.xpose.msra.mxu0 0.0
    %60 = vmatprep.subr.mxu0 0.0
    %61 = vmatpush1.xpose.msra.mxu0 0.0
    %62 = vmatprep.subr.mxu0 0.0
    %63 = vmatpush1.xpose.msra.mxu0 0.0
    %64 = vmatprep.subr.mxu0 0.0
    %65 = vmatpush1.xpose.msra.mxu0 0.0
    %66 = vmatprep.subr.mxu0 0.0
    %67 = vmatpush1.xpose.msra.mxu0 0.0
    %68 = vmatprep.subr.mxu0 0.0
    %69 = vmatpush1.xpose.msra.mxu0 0.0
    %70 = vmatprep.subr.mxu0 0.0
    %71 = vmatpush1.xpose.msra.mxu0 0.0
    %72 = vmatprep.subr.mxu0 0.0
    %73 = vmatpush1.xpose.msra.mxu0 0.0
    %74 = vmatprep.subr.mxu0 0.0
    %75 = vmatpush1.xpose.msra.mxu0 0.0
    %76 = vmatprep.subr.mxu0 0.0
    %77 = vmatpush1.xpose.msra.mxu0 0.0
    %78 = vmatprep.subr.mxu0 0.0
    %79 = vmatpush1.xpose.msra.mxu0 0.0
    %80 = vmatprep.subr.mxu0 0.0
    %81 = vmatpush1.xpose.msra.mxu0 0.0
    %82 = vmatprep.subr.mxu0 0.0
    %83 = vmatpush1.xpose.msra.mxu0 0.0
    %84 = vmatprep.subr.mxu0 0.0
    %85 = vmatpush1.xpose.msra.mxu0 0.0
    %86 = vmatprep.subr.mxu0 0.0
    %87 = vmatpush1.xpose.msra.mxu0 0.0
    %88 = vmatprep.subr.mxu0 0.0
    %89 = vmatpush1.xpose.msra.mxu0 0.0
    %90 = vmatprep.subr.mxu0 0.0
    %91 = vmatpush1.xpose.msra.mxu0 0.0
    %92 = vmatprep.subr.mxu0 0.0
    %93 = vmatpush1.xpose.msra.mxu0 0.0
    %94 = vmatprep.mubr.f32.mxu0 %v23
    %95 = vmatmul.mubr.f32.gmra.mrb[0].mxu0 %v22
    %v96 = vpop.f32.mrb[0].mxu0
    %v97 = vadd.f32 0.0, %v96
    %v98 = vpop.f32.mrb[0].mxu0
    %99 = vmatprep.mubr.f32.mxu0 %v25
    %100 = vmatmul.mubr.f32.gmra.mrb[0].mxu0 %v24
    %v101 = vpop.f32.mrb[0].mxu0
    %v102 = vadd.f32 0.0, %v101
    %v103 = vpop.f32.mrb[0].mxu0
    %104 = vmatprep.mubr.f32.mxu0 %v27
    %105 = vmatmul.mubr.f32.gmra.mrb[0].mxu0 %v26
    %v106 = vpop.f32.mrb[0].mxu0
    %v107 = vadd.f32 0.0, %v106
    %v108 = vpop.f32.mrb[0].mxu0
    %109 = vmatprep.mubr.f32.mxu0 %v29
    %110 = vmatmul.mubr.f32.gmra.mrb[0].mxu0 %v28
    %v111 = vpop.f32.mrb[0].mxu0
    %v112 = vadd.f32 0.0, %v111
    %v113 = vpop.f32.mrb[0].mxu0
    %114 = vdwg.mxu0
    %v115 = vadd.f32 %v18, %v97
    %v116 = vadd.f32 %v19, %v102
    %v117 = vadd.f32 %v20, %v107
    %v118 = vadd.f32 %v21, %v112
    %vm119 = vcmask 261120
    %120 = vst.msk [vmem:[#allocation2] sm:$0xff] %vm119, %v115
    %121 = vst.msk [vmem:[#allocation2 + $0x8] sm:$0xff] %vm119, %v116
    %122 = vst.msk [vmem:[#allocation2 + $0x10] sm:$0xff] %vm119, %v117
    %123 = vst.msk [vmem:[#allocation2 + $0x18] sm:$0xff] %vm119, %v118
    // Predicated region
    $region10: #{gram_matrix.1} parent=1 // pred_check
      %p124 = pneg %p9
    $region11: #{gram_matrix.1} parent=1 // pred_check_branch
      %126 = sbr.rel (%p124) target = $region13
    $region12: #{gram_matrix.1} parent=1 // pred_region
      %v127 = vld [vmem:[#allocation2] sm:$0xff]
      %v128 = vld [vmem:[#allocation2 + $0x8] sm:$0xff]
      %v129 = vld [vmem:[#allocation2 + $0x10] sm:$0xff]
      %v130 = vld [vmem:[#allocation2 + $0x18] sm:$0xff]
      %v131 = vmul.f32 %v127, 0.00012207031
      %v132 = vmul.f32 %v128, 0.00012207031
      %v133 = vmul.f32 %v129, 0.00012207031
      %v134 = vmul.f32 %v130, 0.00012207031
      %135 = vst.msk [vmem:[#allocation3] sm:$0xff] %vm119, %v131
      %136 = vst.msk [vmem:[#allocation3 + $0x8] sm:$0xff] %vm119, %v132
      %137 = vst.msk [vmem:[#allocation3 + $0x10] sm:$0xff] %vm119, %v133
      %138 = vst.msk [vmem:[#allocation3 + $0x18] sm:$0xff] %vm119, %v134
    $region13: #{gram_matrix.1} parent=1 // pred_fallthru
      _
    // Predicated region
    $region14: #{gram_matrix.1} parent=1 // pred_check
      _
    $region15: #{gram_matrix.1} parent=1 // pred_check_branch
      %140 = sbr.rel (0) target = $region17
    $region16: #{gram_matrix.1} parent=1 // pred_region
      %s142 = ssub.s32 512, 512
      %143 = vsyncadd [#allocation4], %s142
      %s144 = sshll.u32 [#allocation3], 4
      %s145 = int_to_ptr.vmem [resolvable:$true] %s144
      %150 = dma.vmem_to_hbm [thread:$0]  %s145, 512, %s1, [#allocation4], 128, 128, 8
    $region17: #{gram_matrix.1} parent=1 // pred_fallthru
      _
    // Predicated region
    $region18: #{gram_matrix.1} parent=1 // pred_check
      _
    $region19: #{gram_matrix.1} parent=1 // pred_check_branch
      %152 = sbr.rel (0) target = $region21
    $region20: #{gram_matrix.1} parent=1 // pred_region
      %153 = dma.done [#allocation4], 512
    $region21: #{gram_matrix.1} parent=1 // pred_fallthru
      _
    %154 = vsyncpa [#allocation4], 1

</llo_original>
